<compile_context>
chip_gen: v7x
topology: tpu7x:2x2x1
jax: 0.10.0
libtpu: 0.0.40
codegen_flags: <defaults>
</compile_context>

<pallas_src>
import jax
import jax.numpy as jnp
from jax.experimental import pallas as pl
from jax.experimental.pallas import tpu as pltpu

_LANE_CANDIDATES = (1024, 896, 768, 640, 512, 384, 256, 128)  # lane-dense, multiples of 128
_SUBLANE_ROUND = 32   # multiple of sublane packing for f32 (8), bf16 (16), int8/fp8 (32)


def _scale_kernel(scale_ref, x_ref, o_ref):
    # scale_ref: (1,) scalar in SMEM; x_ref / o_ref: (tile_rows, lanes) tiles in VMEM.
    o_ref[...] = (x_ref[...] * scale_ref[0]).astype(o_ref.dtype)


def _device_kind():
    try:
        return jax.devices()[0].device_kind.lower()
    except Exception:
        return ""


def _scale_bulk(x2d, scale1d, out_dtype, tile_rows_override=None):
    rows, lanes = x2d.shape
    in_bytes = x2d.dtype.itemsize
    out_bytes = jnp.dtype(out_dtype).itemsize
    itemsize = max(in_bytes, out_bytes)

    kind = _device_kind()
    if ("v5 lite" in kind) or ("v5e" in kind) or ("v5lite" in kind):
        target_tile_bytes = 2 << 20     # v5e: 16 MiB scoped-VMEM default, slower HBM
        multi_tc = False
    elif "v7" in kind:
        target_tile_bytes = 8 << 20     # v7x: ~3.2 TB/s HBM -> amortize ~0.35us/step overhead
        multi_tc = True                 # 2 TensorCores per chip
    else:
        target_tile_bytes = 4 << 20     # v6e & default
        multi_tc = ("v4" in kind) or ("v5p" in kind)

    if tile_rows_override is not None:
        tile_rows = int(tile_rows_override)
    else:
        tile_rows = max(
            _SUBLANE_ROUND,
            (target_tile_bytes // (lanes * itemsize)) // _SUBLANE_ROUND * _SUBLANE_ROUND,
        )
        # On multi-TC parts, make sure mid-size inputs produce a grid of >= 2 blocks so
        # the "parallel" axis can be sharded across both cores.
        if multi_tc and rows * lanes * itemsize >= (2 << 20) and rows >= 2 * _SUBLANE_ROUND:
            half = -(-((rows + 1) // 2) // _SUBLANE_ROUND) * _SUBLANE_ROUND
            tile_rows = min(tile_rows, half)

    if tile_rows >= rows:
        tile_rows = rows            # single full-extent block (exempt from the (8,128) rule)
    grid_rows = pl.cdiv(rows, tile_rows)   # partial last block is sublane-masked by Pallas

    tile_bytes = tile_rows * lanes * itemsize
    # in + out, double-buffered, plus headroom; stays under v7x's 64 MiB physical VMEM.
    vmem_limit = int(min(64 << 20, max(32 << 20, 4 * tile_bytes + (4 << 20))))

    return pl.pallas_call(
        _scale_kernel,
        out_shape=jax.ShapeDtypeStruct((rows, lanes), out_dtype),
        grid=(grid_rows,),
        in_specs=[
            pl.BlockSpec(memory_space=pltpu.MemorySpace.SMEM),        # (1,) scalar param
            pl.BlockSpec((tile_rows, lanes), lambda i: (i, 0)),       # streamed input tiles
        ],
        out_specs=pl.BlockSpec((tile_rows, lanes), lambda i: (i, 0)),
        compiler_params=pltpu.CompilerParams(
            dimension_semantics=("parallel",),
            vmem_limit_bytes=vmem_limit,
        ),
        cost_estimate=pl.CostEstimate(
            flops=rows * lanes,
            transcendentals=0,
            bytes_accessed=rows * lanes * (in_bytes + out_bytes),
        ),
    )(scale1d, x2d)


def scale_forward(x, scale, *, tile_rows=None):
    """FCOS `Scale` forward: input * scale (learnable scalar parameter).

    x: any shape / float dtype (NCHW in the FCOS use-case).
    scale: shape (1,) parameter (float32, like nn.Parameter(FloatTensor([v]))).
    tile_rows: optional row-tile override (multiple of 8); mainly for tests.
    """
    orig_shape = x.shape
    n = x.size
    out_dtype = jnp.promote_types(x.dtype, scale.dtype)   # torch promotion: bf16*f32 -> f32
    scale1d = scale.reshape(1)

    # Prefer a lane width that divides numel exactly: no pad copy, no output-strip copy.
    lanes = next((c for c in _LANE_CANDIDATES if n % c == 0), None)
    if lanes is not None:
        out2d = _scale_bulk(x.reshape(n // lanes, lanes), scale1d, out_dtype, tile_rows)
        return out2d.reshape(orig_shape)

    # Ragged numel: stream the bulk through the kernel, do the (< 1024-elem) tail in XLA.
    lanes = _LANE_CANDIDATES[0]
    rows_full = n // lanes
    flat = x.reshape(-1)
    if rows_full == 0:          # tiny tensor: not worth a kernel launch
        return (flat * scale1d[0]).astype(out_dtype).reshape(orig_shape)
    bulk = rows_full * lanes
    out_bulk = _scale_bulk(flat[:bulk].reshape(rows_full, lanes), scale1d, out_dtype, tile_rows)
    out_tail = (flat[bulk:] * scale1d[0]).astype(out_dtype)
    return jnp.concatenate([out_bulk.reshape(-1), out_tail]).reshape(orig_shape)


if __name__ == "__main__":
    key = jax.random.PRNGKey(0)

    # Deterministic parameter, matching nn.Parameter(torch.FloatTensor([init_value])).
    scale_param = jnp.array([1.5], dtype=jnp.float32)

    # 1) Small NCHW input as used in the FCOS head (numel divisible by 1024 -> no-pad path).
    x_small = jax.random.normal(key, (2, 4, 16, 16), dtype=jnp.float32)
    out_small = jax.block_until_ready(scale_forward(x_small, scale_param))
    assert out_small.shape == x_small.shape and out_small.dtype == x_small.dtype
    assert jnp.array_equal(out_small, x_small * scale_param[0])

    # 2) Ragged numel (1155 elements): bulk kernel + tiny XLA tail, no pad/strip copies.
    x_odd = jax.random.normal(jax.random.PRNGKey(1), (3, 5, 7, 11), dtype=jnp.float32)
    out_odd = jax.block_until_ready(scale_forward(x_odd, scale_param))
    assert out_odd.shape == x_odd.shape
    assert jnp.array_equal(out_odd, x_odd * scale_param[0])

    # 3) Multi-block gridded / pipelined path with a masked partial last row-block
    #    (20 rows of 1024 lanes, tile_rows=8 -> grid=3, last block has 4 valid rows).
    x_grid = jax.random.normal(jax.random.PRNGKey(2), (5, 8, 16, 32), dtype=jnp.float32)
    out_grid = jax.block_until_ready(scale_forward(x_grid, scale_param, tile_rows=8))
    assert jnp.array_equal(out_grid, x_grid * scale_param[0])

    # 4) bf16 input * f32 scale promotes to f32 (matches torch promotion semantics).
    x_bf16 = jax.random.normal(jax.random.PRNGKey(3), (2, 4, 16, 16), dtype=jnp.bfloat16)
    out_bf16 = jax.block_until_ready(scale_forward(x_bf16, scale_param))
    assert out_bf16.dtype == jnp.float32
    assert jnp.array_equal(out_bf16, x_bf16.astype(jnp.float32) * scale_param[0])

    print("KERNEL_OK")
</pallas_src>

<mosaic_0001>
module attributes {stable_mosaic.version = 11 : i64} {
  func.func @_scale_kernel(%arg0: i32, %arg1: memref<1xf32, #tpu.memory_space<smem>>, %arg2: memref<2x1024xf32, #tpu.memory_space<vmem>>, %arg3: memref<2x1024xf32, #tpu.memory_space<vmem>>) attributes {dimension_semantics = [#tpu.dimension_semantics<parallel>], iteration_bounds = array<i64: 1>, scalar_prefetch = 0 : i64, scratch_operands = 0 : i64, tpu.core_type = #tpu.core_type<tc>, window_params = [{transform_indices = @transform_0, window_bounds = array<i64: 1>}, {transform_indices = @transform_1, window_bounds = array<i64: 2, 1024>}, {transform_indices = @transform_2, window_bounds = array<i64: 2, 1024>}]} {
    %c0 = arith.constant 0 : index
    %c0_0 = arith.constant 0 : index
    %0 = vector.load %arg2[%c0, %c0_0] : memref<2x1024xf32, #tpu.memory_space<vmem>>, vector<2x1024xf32>
    %c0_1 = arith.constant 0 : index
    %1 = memref.load %arg1[%c0_1] : memref<1xf32, #tpu.memory_space<smem>>
    %2 = vector.broadcast %1 : f32 to vector<2x1024xf32>
    %3 = arith.mulf %0, %2 : vector<2x1024xf32>
    %c0_2 = arith.constant 0 : index
    %c0_3 = arith.constant 0 : index
    %4 = vector.load %arg3[%c0_2, %c0_3] : memref<2x1024xf32, #tpu.memory_space<vmem>>, vector<2x1024xf32>
    tpu.vector_store %arg3[%c0_2, %c0_3], %3 {strides = array<i32>} : memref<2x1024xf32, #tpu.memory_space<vmem>>, vector<2x1024xf32>,
    return
  }
  func.func @transform_0(%arg0: i32) -> i32 {
    %c0_i32 = arith.constant 0 : i32
    %c0_i32_0 = arith.constant 0 : i32
    return %c0_i32 : i32
  }
  func.func @transform_1(%arg0: i32) -> (i32, i32) {
    %c0_i32 = arith.constant 0 : i32
    %c0_i32_0 = arith.constant 0 : i32
    return %arg0, %c0_i32 : i32, i32
  }
  func.func @transform_2(%arg0: i32) -> (i32, i32) {
    %c0_i32 = arith.constant 0 : i32
    %c0_i32_0 = arith.constant 0 : i32
    return %arg0, %c0_i32 : i32, i32
  }
}

</mosaic_0001>

<llo_original>
// kernel: tpu_custom_call.1
$region0: #{tpu_custom_call.1}
  #allocation0 [shape = 'u32[]', space=smem, size = 0x4, offset = 0x4, fixed_abs, tag = 'smem constant byte address 0x4 - core index']
  #allocation1 [shape = 'u32[144,128]{1,0:T(1,128)}', space=vmem, size = 0x12000, scoped, tag = 'internal scratch']
  #allocation2 [shape = 'f32[1]{0:T(128)S(6)}', space=smem, size = 0x200, scoped, tag = 'scoped memory for tpu_custom_call.1']
  %s0 = inlined_call_operand.<no memory space> [shape: f32[1], index: 0, kind: input, shape index: {}]
  %s1 = inlined_call_operand.hbm [shape: f32[2,1024], index: 1, kind: input, shape index: {}]
  %s2 = inlined_call_operand.hbm [shape: f32[2,1024], index: 2, kind: output, shape index: {}]
  %s3 = sld [smem:[#allocation0]]
  $region22: #{tpu_custom_call.1} parent=0
    _
  %s5 = ssub.s32 1, %s3
  %s6 = scalar_select 0, %s5, %s3
  %7 = sst [smem:[#allocation2]] %s0
  $region1: #{tpu_custom_call.1} parent=0
    #allocation3 [shape = 'u8[8192]{0}', space=vmem, size = 0x2000, scoped, tag = 'input window, operand 1, single buffered']
    #allocation4 [shape = 's32[1]{0}', space=sflag, size = 0x4, scoped, tag = 'scoped memory for tpu_custom_call.1']
    #allocation5 [shape = 's32[1]{0}', space=sflag, size = 0x4, scoped, tag = 'scoped memory for tpu_custom_call.1']
    #allocation6 [shape = 'u8[8192]{0}', space=vmem, size = 0x2000, scoped, tag = 'output window, operand 0, single buffered']
    %8 = vsyncpa [#allocation4], 0
    %9 = vsyncpa [#allocation5], 0
    // Predicated region
    $region2: #{tpu_custom_call.1} parent=1 // pred_check
      _
    $region3: #{tpu_custom_call.1} parent=1 // pred_check_branch
      %11 = sbr.rel (0) target = $region5
    $region4: #{tpu_custom_call.1} parent=1 // pred_region
      _
    $region5: #{tpu_custom_call.1} parent=1 // pred_fallthru
      _
    // Predicated region
    $region6: #{tpu_custom_call.1} parent=1 // pred_check
      _
    $region7: #{tpu_custom_call.1} parent=1 // pred_check_branch
      %13 = sbr.rel (0) target = $region9
    $region8: #{tpu_custom_call.1} parent=1 // pred_region
      %s15 = ssub.s32 256, 256
      %16 = vsyncadd [#allocation4], %s15
      %s18 = sshll.u32 [#allocation3], 4
      %s19 = int_to_ptr.vmem [resolvable:$true] %s18
      %21 = dma.hbm_to_vmem [thread:$0]  %s1, 256, %s19, [#allocation4]
    $region9: #{tpu_custom_call.1} parent=1 // pred_fallthru
      _
    // Predicated region
    $region10: #{tpu_custom_call.1} parent=1 // pred_check
      _
    $region11: #{tpu_custom_call.1} parent=1 // pred_check_branch
      %23 = sbr.rel (0) target = $region13
    $region12: #{tpu_custom_call.1} parent=1 // pred_region
      %24 = dma.done [#allocation4], 256
    $region13: #{tpu_custom_call.1} parent=1 // pred_fallthru
      _
    %v25 = vld [vmem:[#allocation3] sm:$0xff]
    %v26 = vld [vmem:[#allocation3 + $0x8] sm:$0xff]
    %s27 = sld [smem:[#allocation2]]
    %v28 = vstv %s27
    %v29 = vmul.f32 %v25, %v28
    %v30 = vmul.f32 %v26, %v28
    %31 = vst [vmem:[#allocation6] sm:$0xff] %v29
    %32 = vst [vmem:[#allocation6 + $0x8] sm:$0xff] %v30
    // Predicated region
    $region14: #{tpu_custom_call.1} parent=1 // pred_check
      _
    $region15: #{tpu_custom_call.1} parent=1 // pred_check_branch
      %34 = sbr.rel (0) target = $region17
    $region16: #{tpu_custom_call.1} parent=1 // pred_region
      %s36 = ssub.s32 256, 256
      %37 = vsyncadd [#allocation5], %s36
      %s39 = sshll.u32 [#allocation6], 4
      %s40 = int_to_ptr.vmem [resolvable:$true] %s39
      %42 = dma.vmem_to_hbm [thread:$0]  %s40, 256, %s2, [#allocation5]
    $region17: #{tpu_custom_call.1} parent=1 // pred_fallthru
      _
    // Predicated region
    $region18: #{tpu_custom_call.1} parent=1 // pred_check
      _
    $region19: #{tpu_custom_call.1} parent=1 // pred_check_branch
      %44 = sbr.rel (0) target = $region21
    $region20: #{tpu_custom_call.1} parent=1 // pred_region
      %45 = dma.done [#allocation5], 256
    $region21: #{tpu_custom_call.1} parent=1 // pred_fallthru
      _
    %46 = vsyncpa [#allocation4], 1
    %47 = vsyncpa [#allocation5], 1

</llo_original>
